<compile_context>
chip_gen: v5e
topology: v5e:2x2
jax: 0.10.0
libtpu: 0.0.40
codegen_flags: <defaults>
</compile_context>

<pallas_src>
import jax
import jax.numpy as jnp
from jax import lax
from jax.experimental import pallas as pl
from jax.experimental.pallas import tpu as pltpu

# Module hyper-parameters (seq scaled small for the demo, same semantics).
N_EMBD = 384        # C  (matches train.py's n_embd)
HEAD_SIZE = 64      # H
T_LEN = 64          # T  (<= block_size=256, causal mask built for T)
BATCH = 2           # B

NEG_BIG = -1e30     # finite large-negative mask value (avoids inf-inf=NaN)


def head_kernel(x_ref, wkqv_ref, o_ref):
    # Single grid step: the whole (B, T, C) activation block and the packed
    # (C, 3H) weight are resident in VMEM (<400 KB total, <1% of VMEM on v7x).
    H = HEAD_SIZE
    B, T, C = x_ref.shape

    # In-kernel f32 -> bf16 cast (VPU); avoids a separate wrapper cast over HBM.
    x = x_ref[...].astype(jnp.bfloat16)                  # (B, T, C)
    w = wkqv_ref[...]                                    # (C, 3H) bf16, scale in Q block

    # Fused K|Q|V projection: flatten B*T into the MXU M dimension (M = 128)
    # and run one wide-N matmul instead of 3 per-batch N=64 passes.
    x2d = x.reshape(B * T, C)
    kqv = jnp.dot(x2d, w, preferred_element_type=jnp.float32)   # (B*T, 3H) f32
    kqv = kqv.reshape(B, T, 3 * H)

    # TODO(synk): k/q/v column slices sit at lane offsets 0/64/128 of a 192-lane
    # row (not all vreg-aligned); fusing the parent MultiHead's heads would make
    # each block a 128-multiple and these slices free views.
    k = kqv[:, :, 0 * H:1 * H].astype(jnp.bfloat16)
    q = kqv[:, :, 1 * H:2 * H].astype(jnp.bfloat16)      # 1/sqrt(H) already folded into W
    v = kqv[:, :, 2 * H:3 * H].astype(jnp.bfloat16)

    # q @ k^T batched over B; contraction on the last dim of both operands
    # (MXU transposed-RHS form, keeps the XLU free).
    wei = jnp.einsum('bqd,bkd->bqk', q, k,
                     preferred_element_type=jnp.float32)        # (B, T, T) f32

    # Causal (lower-triangular) mask.
    row = lax.broadcasted_iota(jnp.int32, (T, T), 0)
    col = lax.broadcasted_iota(jnp.int32, (T, T), 1)
    wei = jnp.where((col <= row)[None, :, :], wei, NEG_BIG)

    # Numerically stable softmax in f32; approx reciprocal lowers to the EUP.
    wei = wei - jnp.max(wei, axis=-1, keepdims=True)
    p = jnp.exp(wei)
    p = p * pl.reciprocal(jnp.sum(p, axis=-1, keepdims=True), approx=True)

    # TODO(synk): nn.Dropout(p=0.2) on the attention weights is a train-time RNG
    # op; applied here as identity (eval-mode behavior).

    out = jnp.einsum('bqk,bkd->bqd', p.astype(jnp.bfloat16), v,
                     preferred_element_type=jnp.float32)        # (B, T, H) f32
    o_ref[...] = out.astype(o_ref.dtype)
    # TODO(synk): a single Head forces a 64-lane output (masked partial stores);
    # fusing all heads of the parent MultiHead module would make it lane-dense.


def pack_head_weights(wk, wq, wv):
    # Done ONCE at parameter-build time (not per forward call): pack Wk|Wq|Wv
    # into (C, 3H) bf16 and fold the 1/sqrt(H) = 1/8 softmax scale (exactly
    # representable) into the Q column block.
    H = wq.shape[1]
    scale = float(H) ** -0.5
    return jnp.concatenate([wk, wq * scale, wv], axis=1).astype(jnp.bfloat16)


def head_forward(x, wkqv):
    B, T, C = x.shape
    H = wkqv.shape[1] // 3
    cost = pl.CostEstimate(
        flops=2 * B * T * (C * 3 * H) + 4 * B * T * T * H,   # proj + qk^T + pv
        transcendentals=B * T * T,                            # exp in softmax
        bytes_accessed=(B * T * C * 4) + (C * 3 * H * 2) + (B * T * H * 2),
    )
    return pl.pallas_call(
        head_kernel,
        out_shape=jax.ShapeDtypeStruct((B, T, H), jnp.bfloat16),
        grid_spec=pltpu.PrefetchScalarGridSpec(
            num_scalar_prefetch=0,
            grid=(1,),   # single step: whole problem fits VMEM, no step overhead
            in_specs=[
                pl.BlockSpec((B, T, C), lambda i: (0, 0, 0)),    # x (f32, cast in-kernel)
                pl.BlockSpec((C, 3 * H), lambda i: (0, 0)),      # packed W_kqv (bf16)
            ],
            out_specs=pl.BlockSpec((B, T, H), lambda i: (0, 0, 0)),
        ),
        compiler_params=pltpu.CompilerParams(
            dimension_semantics=("arbitrary",),
        ),
        cost_estimate=cost,
    )(x, wkqv)


def head_reference(x, wk, wq, wv):
    # Pure-JAX f32 reference (same math as the PyTorch module, eval mode).
    k = x @ wk
    q = x @ wq
    v = x @ wv
    wei = (q @ jnp.swapaxes(k, -2, -1)) * (k.shape[-1] ** -0.5)
    T = x.shape[1]
    mask = jnp.tril(jnp.ones((T, T), dtype=bool))
    wei = jnp.where(mask[None, :, :], wei, -jnp.inf)
    wei = jax.nn.softmax(wei, axis=-1)
    return wei @ v


if __name__ == "__main__":
    key = jax.random.PRNGKey(0)
    kx, kk, kq, kv = jax.random.split(key, 4)

    x = jax.random.normal(kx, (BATCH, T_LEN, N_EMBD), dtype=jnp.float32)
    # Deterministic "kaiming-ish" init for the three bias-free linears.
    init_scale = N_EMBD ** -0.5
    wk = jax.random.normal(kk, (N_EMBD, HEAD_SIZE), dtype=jnp.float32) * init_scale
    wq = jax.random.normal(kq, (N_EMBD, HEAD_SIZE), dtype=jnp.float32) * init_scale
    wv = jax.random.normal(kv, (N_EMBD, HEAD_SIZE), dtype=jnp.float32) * init_scale

    # Weight packing happens once, outside the per-call path.
    wkqv = pack_head_weights(wk, wq, wv)

    out = head_forward(x, wkqv)
    out = jax.block_until_ready(out)

    ref = head_reference(x, wk, wq, wv)
    assert out.shape == (BATCH, T_LEN, HEAD_SIZE)
    # Loosened tolerance: bf16 matmuls/output + approx reciprocal (expected
    # quantization vs the f32 reference).
    diff = jnp.max(jnp.abs(out.astype(jnp.float32) - ref))
    assert jnp.allclose(out.astype(jnp.float32), ref, atol=5e-2, rtol=5e-2), (
        f"max abs diff = {diff}")

    print("KERNEL_OK")
</pallas_src>

<mosaic_0001>
module attributes {stable_mosaic.version = 11 : i64} {
  func.func @head_kernel(%arg0: i32, %arg1: memref<2x64x384xf32, #tpu.memory_space<vmem>>, %arg2: memref<384x192xbf16, #tpu.memory_space<vmem>>, %arg3: memref<2x64x64xbf16, #tpu.memory_space<vmem>>) attributes {dimension_semantics = [#tpu.dimension_semantics<arbitrary>], iteration_bounds = array<i64: 1>, scalar_prefetch = 0 : i64, scratch_operands = 0 : i64, tpu.core_type = #tpu.core_type<tc>, window_params = [{pipeline_mode = #tpu.pipeline_mode<synchronous>, transform_indices = @transform_0, window_bounds = array<i64: 2, 64, 384>}, {pipeline_mode = #tpu.pipeline_mode<synchronous>, transform_indices = @transform_1, window_bounds = array<i64: 384, 192>}, {pipeline_mode = #tpu.pipeline_mode<synchronous>, transform_indices = @transform_2, window_bounds = array<i64: 2, 64, 64>}]} {
    %c0 = arith.constant 0 : index
    %c0_0 = arith.constant 0 : index
    %c0_1 = arith.constant 0 : index
    %0 = vector.load %arg1[%c0, %c0_0, %c0_1] : memref<2x64x384xf32, #tpu.memory_space<vmem>>, vector<2x64x384xf32>
    %1 = arith.truncf %0 : vector<2x64x384xf32> to vector<2x64x384xbf16>
    %c0_2 = arith.constant 0 : index
    %c0_3 = arith.constant 0 : index
    %2 = vector.load %arg2[%c0_2, %c0_3] : memref<384x192xbf16, #tpu.memory_space<vmem>>, vector<384x192xbf16>
    %3 = vector.shape_cast %1 : vector<2x64x384xbf16> to vector<128x384xbf16>
    %cst = arith.constant dense<0.000000e+00> : vector<128x192xf32>
    %4 = tpu.matmul %3, %2, %cst {dimension_numbers = #tpu.dot_dimension_numbers<[1], [0], [0], [1], [0, 0, 1, 1], [], []>} : vector<128x384xbf16>, vector<384x192xbf16>, vector<128x192xf32> -> vector<128x192xf32>
    %5 = vector.shape_cast %4 : vector<128x192xf32> to vector<2x64x192xf32>
    %6 = vector.extract_strided_slice %5 {offsets = [0, 0, 0], sizes = [2, 64, 64], strides = [1, 1, 1]} : vector<2x64x192xf32> to vector<2x64x64xf32>
    %7 = arith.truncf %6 : vector<2x64x64xf32> to vector<2x64x64xbf16>
    %8 = vector.extract_strided_slice %5 {offsets = [0, 0, 64], sizes = [2, 64, 64], strides = [1, 1, 1]} : vector<2x64x192xf32> to vector<2x64x64xf32>
    %9 = arith.truncf %8 : vector<2x64x64xf32> to vector<2x64x64xbf16>
    %10 = vector.extract_strided_slice %5 {offsets = [0, 0, 128], sizes = [2, 64, 64], strides = [1, 1, 1]} : vector<2x64x192xf32> to vector<2x64x64xf32>
    %11 = arith.truncf %10 : vector<2x64x64xf32> to vector<2x64x64xbf16>
    "tpu.trace_start"() <{level = 10 : i32, message = "bqd,bkd->bqk"}> : () -> ()
    %cst_4 = arith.constant dense<0.000000e+00> : vector<2x64x64xf32>
    %12 = tpu.matmul %9, %7, %cst_4 {dimension_numbers = #tpu.dot_dimension_numbers<[2], [2], [1], [1], [0, 0, 0, 1, 1, 1], [0], [0]>} : vector<2x64x64xbf16>, vector<2x64x64xbf16>, vector<2x64x64xf32> -> vector<2x64x64xf32>
    "tpu.trace_stop"() : () -> ()
    %13 = tpu.iota {dimensions = array<i32: 0>} : vector<64x64xi32>
    %14 = tpu.iota {dimensions = array<i32: 1>} : vector<64x64xi32>
    %15 = arith.cmpi sle, %14, %13 : vector<64x64xi32>
    %16 = vector.shape_cast %15 : vector<64x64xi1> to vector<1x64x64xi1>
    %cst_5 = arith.constant -1.000000e+30 : f32
    %17 = vector.shape_cast %16 : vector<1x64x64xi1> to vector<1x64x64xi1>
    %18 = vector.broadcast %17 : vector<1x64x64xi1> to vector<2x64x64xi1>
    %19 = vector.broadcast %cst_5 : f32 to vector<2x64x64xf32>
    %20 = arith.select %18, %12, %19 : vector<2x64x64xi1>, vector<2x64x64xf32>
    %cst_6 = arith.constant dense<0xFF800000> : vector<2x64xf32>
    %21 = vector.multi_reduction <maximumf>, %20, %cst_6 [2] : vector<2x64x64xf32> to vector<2x64xf32>
    %22 = vector.shape_cast %21 : vector<2x64xf32> to vector<2x64x1xf32>
    %23 = vector.broadcast %22 : vector<2x64x1xf32> to vector<2x64x64xf32>
    %24 = arith.subf %20, %23 : vector<2x64x64xf32>
    %25 = math.exp %24 : vector<2x64x64xf32>
    %cst_7 = arith.constant dense<0.000000e+00> : vector<2x64xf32>
    %26 = vector.multi_reduction <add>, %25, %cst_7 [2] : vector<2x64x64xf32> to vector<2x64xf32>
    %27 = vector.shape_cast %26 : vector<2x64xf32> to vector<2x64x1xf32>
    %28 = tpu.reciprocal %27 {approx = true} : vector<2x64x1xf32> -> vector<2x64x1xf32>
    %29 = vector.broadcast %28 : vector<2x64x1xf32> to vector<2x64x64xf32>
    %30 = arith.mulf %25, %29 : vector<2x64x64xf32>
    %31 = arith.truncf %30 : vector<2x64x64xf32> to vector<2x64x64xbf16>
    "tpu.trace_start"() <{level = 10 : i32, message = "bqk,bkd->bqd"}> : () -> ()
    %cst_8 = arith.constant dense<0.000000e+00> : vector<2x64x64xf32>
    %32 = tpu.matmul %31, %11, %cst_8 {dimension_numbers = #tpu.dot_dimension_numbers<[2], [1], [1], [2], [0, 0, 0, 1, 1, 2], [0], [0]>} : vector<2x64x64xbf16>, vector<2x64x64xbf16>, vector<2x64x64xf32> -> vector<2x64x64xf32>
    "tpu.trace_stop"() : () -> ()
    %33 = arith.truncf %32 : vector<2x64x64xf32> to vector<2x64x64xbf16>
    %c0_9 = arith.constant 0 : index
    %c0_10 = arith.constant 0 : index
    %c0_11 = arith.constant 0 : index
    %34 = vector.load %arg3[%c0_9, %c0_10, %c0_11] : memref<2x64x64xbf16, #tpu.memory_space<vmem>>, vector<2x64x64xbf16>
    tpu.vector_store %arg3[%c0_9, %c0_10, %c0_11], %33 {strides = array<i32>} : memref<2x64x64xbf16, #tpu.memory_space<vmem>>, vector<2x64x64xbf16>,
    return
  }
  func.func @transform_0(%arg0: i32) -> (i32, i32, i32) {
    %c0_i32 = arith.constant 0 : i32
    %c0_i32_0 = arith.constant 0 : i32
    %c0_i32_1 = arith.constant 0 : i32
    %c0_i32_2 = arith.constant 0 : i32
    return %c0_i32, %c0_i32_0, %c0_i32_1 : i32, i32, i32
  }
  func.func @transform_1(%arg0: i32) -> (i32, i32) {
    %c0_i32 = arith.constant 0 : i32
    %c0_i32_0 = arith.constant 0 : i32
    %c0_i32_1 = arith.constant 0 : i32
    return %c0_i32, %c0_i32_0 : i32, i32
  }
  func.func @transform_2(%arg0: i32) -> (i32, i32, i32) {
    %c0_i32 = arith.constant 0 : i32
    %c0_i32_0 = arith.constant 0 : i32
    %c0_i32_1 = arith.constant 0 : i32
    %c0_i32_2 = arith.constant 0 : i32
    return %c0_i32, %c0_i32_0, %c0_i32_1 : i32, i32, i32
  }
}

</mosaic_0001>

<llo_original>
// kernel: tpu_custom_call.1
$region0: #{tpu_custom_call.1}
  #allocation0 [shape = 'u32[]', space=smem, size = 0x4, offset = 0x4, fixed_abs, tag = 'smem constant byte address 0x4 - core index']
  #allocation1 [shape = 'u32[72,128]{1,0:T(1,128)}', space=vmem, size = 0x9000, scoped, tag = 'internal scratch']
  %s0 = inlined_call_operand.vmem [shape: f32[2,64,384], index: 0, kind: input, shape index: {}]
  %s1 = inlined_call_operand.vmem [shape: bf16[384,192], index: 1, kind: input, shape index: {}]
  %s2 = inlined_call_operand.hbm [shape: bf16[2,64,64], index: 2, kind: output, shape index: {}]
  %s3 = sld [smem:[#allocation0]]
  $region18: #{tpu_custom_call.1} parent=0
    _
  %s5 = ssub.s32 1, %s3
  %s6 = scalar_select 0, %s5, %s3
  $region1: #{tpu_custom_call.1} parent=0
    #allocation2 [shape = 'u8[32768]{0}', space=vmem, size = 0x8000, scoped, tag = 'output window, operand 0, single buffered']
    #allocation3 [shape = 's32[1]{0}', space=sflag, size = 0x4, scoped, tag = 'scoped memory for tpu_custom_call.1']
    %7 = vsyncpa [#allocation3], 0
    // Predicated region
    $region2: #{tpu_custom_call.1} parent=1 // pred_check
      _
    $region3: #{tpu_custom_call.1} parent=1 // pred_check_branch
      %9 = sbr.rel (0) target = $region5
    $region4: #{tpu_custom_call.1} parent=1 // pred_region
      _
    $region5: #{tpu_custom_call.1} parent=1 // pred_fallthru
      _
    // Predicated region
    $region6: #{tpu_custom_call.1} parent=1 // pred_check
      _
    $region7: #{tpu_custom_call.1} parent=1 // pred_check_branch
      %11 = sbr.rel (0) target = $region9
    $region8: #{tpu_custom_call.1} parent=1 // pred_region
      _
    $region9: #{tpu_custom_call.1} parent=1 // pred_fallthru
      _
    %v13 = vld [vmem:[%s0] sm:$0xff]
    %v14 = vld [vmem:[%s0 + $0x8] sm:$0xff]
    %v15 = vld [vmem:[%s0 + $0x10] sm:$0xff]
    %v16 = vld [vmem:[%s0 + $0x18] sm:$0xff]
    %v17 = vld [vmem:[%s0 + $0x20] sm:$0xff]
    %v18 = vld [vmem:[%s0 + $0x28] sm:$0xff]
    %v19 = vld [vmem:[%s0 + $0x30] sm:$0xff]
    %v20 = vld [vmem:[%s0 + $0x38] sm:$0xff]
    %v21 = vld [vmem:[%s0 + $0x40] sm:$0xff]
    %v22 = vld [vmem:[%s0 + $0x48] sm:$0xff]
    %v23 = vld [vmem:[%s0 + $0x50] sm:$0xff]
    %v24 = vld [vmem:[%s0 + $0x58] sm:$0xff]
    %v25 = vld [vmem:[%s0 + $0x60] sm:$0xff]
    %v26 = vld [vmem:[%s0 + $0x68] sm:$0xff]
    %v27 = vld [vmem:[%s0 + $0x70] sm:$0xff]
    %v28 = vld [vmem:[%s0 + $0x78] sm:$0xff]
    %v29 = vld [vmem:[%s0 + $0x80] sm:$0xff]
    %v30 = vld [vmem:[%s0 + $0x88] sm:$0xff]
    %v31 = vld [vmem:[%s0 + $0x90] sm:$0xff]
    %v32 = vld [vmem:[%s0 + $0x98] sm:$0xff]
    %v33 = vld [vmem:[%s0 + $0xa0] sm:$0xff]
    %v34 = vld [vmem:[%s0 + $0xa8] sm:$0xff]
    %v35 = vld [vmem:[%s0 + $0xb0] sm:$0xff]
    %v36 = vld [vmem:[%s0 + $0xb8] sm:$0xff]
    %v37 = vld [vmem:[%s0 + $0xc0] sm:$0xff]
    %v38 = vld [vmem:[%s0 + $0xc8] sm:$0xff]
    %v39 = vld [vmem:[%s0 + $0xd0] sm:$0xff]
    %v40 = vld [vmem:[%s0 + $0xd8] sm:$0xff]
    %v41 = vld [vmem:[%s0 + $0xe0] sm:$0xff]
    %v42 = vld [vmem:[%s0 + $0xe8] sm:$0xff]
    %v43 = vld [vmem:[%s0 + $0xf0] sm:$0xff]
    %v44 = vld [vmem:[%s0 + $0xf8] sm:$0xff]
    %v45 = vld [vmem:[%s0 + $0x100] sm:$0xff]
    %v46 = vld [vmem:[%s0 + $0x108] sm:$0xff]
    %v47 = vld [vmem:[%s0 + $0x110] sm:$0xff]
    %v48 = vld [vmem:[%s0 + $0x118] sm:$0xff]
    %v49 = vld [vmem:[%s0 + $0x120] sm:$0xff]
    %v50 = vld [vmem:[%s0 + $0x128] sm:$0xff]
    %v51 = vld [vmem:[%s0 + $0x130] sm:$0xff]
    %v52 = vld [vmem:[%s0 + $0x138] sm:$0xff]
    %v53 = vld [vmem:[%s0 + $0x140] sm:$0xff]
    %v54 = vld [vmem:[%s0 + $0x148] sm:$0xff]
    %v55 = vld [vmem:[%s0 + $0x150] sm:$0xff]
    %v56 = vld [vmem:[%s0 + $0x158] sm:$0xff]
    %v57 = vld [vmem:[%s0 + $0x160] sm:$0xff]
    %v58 = vld [vmem:[%s0 + $0x168] sm:$0xff]
    %v59 = vld [vmem:[%s0 + $0x170] sm:$0xff]
    %v60 = vld [vmem:[%s0 + $0x178] sm:$0xff]
    %v61 = vpack.c.bf16 %v14, %v13
    %v62 = vpack.c.bf16 %v15, %v15
    %v63 = vpack.c.bf16 %v17, %v16
    %v64 = vpack.c.bf16 %v18, %v18
    %v65 = vpack.c.bf16 %v20, %v19
    %v66 = vpack.c.bf16 %v21, %v21
    %v67 = vpack.c.bf16 %v23, %v22
    %v68 = vpack.c.bf16 %v24, %v24
    %v69 = vpack.c.bf16 %v26, %v25
    %v70 = vpack.c.bf16 %v27, %v27
    %v71 = vpack.c.bf16 %v29, %v28
    %v72 = vpack.c.bf16 %v30, %v30
    %v73 = vpack.c.bf16 %v32, %v31
    %v74 = vpack.c.bf16 %v33, %v33
    %v75 = vpack.c.bf16 %v35, %v34
    %v76 = vpack.c.bf16 %v36, %v36
    %v77 = vpack.c.bf16 %v38, %v37
    %v78 = vpack.c.bf16 %v39, %v39
    %v79 = vpack.c.bf16 %v41, %v40
    %v80 = vpack.c.bf16 %v42, %v42
    %v81 = vpack.c.bf16 %v44, %v43
    %v82 = vpack.c.bf16 %v45, %v45
    %v83 = vpack.c.bf16 %v47, %v46
    %v84 = vpack.c.bf16 %v48, %v48
    %v85 = vpack.c.bf16 %v50, %v49
    %v86 = vpack.c.bf16 %v51, %v51
    %v87 = vpack.c.bf16 %v53, %v52
    %v88 = vpack.c.bf16 %v54, %v54
    %v89 = vpack.c.bf16 %v56, %v55
    %v90 = vpack.c.bf16 %v57, %v57
    %v91 = vpack.c.bf16 %v59, %v58
    %v92 = vpack.c.bf16 %v60, %v60
    %v93 = vld [vmem:[%s1] sm:$0xff]
    %v94 = vld [vmem:[%s1 + $0x8] sm:$0xff]
    %v95 = vld [vmem:[%s1 + $0x10] sm:$0xff]
    %v96 = vld [vmem:[%s1 + $0x18] sm:$0xff]
    %v97 = vld [vmem:[%s1 + $0x20] sm:$0xff]
    %v98 = vld [vmem:[%s1 + $0x28] sm:$0xff]
    %v99 = vld [vmem:[%s1 + $0x30] sm:$0xff]
    %v100 = vld [vmem:[%s1 + $0x38] sm:$0xff]
    %v101 = vld [vmem:[%s1 + $0x40] sm:$0xff]
    %v102 = vld [vmem:[%s1 + $0x48] sm:$0xff]
    %v103 = vld [vmem:[%s1 + $0x50] sm:$0xff]
    %v104 = vld [vmem:[%s1 + $0x58] sm:$0xff]
    %v105 = vld [vmem:[%s1 + $0x60] sm:$0xff]
    %v106 = vld [vmem:[%s1 + $0x68] sm:$0xff]
    %v107 = vld [vmem:[%s1 + $0x70] sm:$0xff]
    %v108 = vld [vmem:[%s1 + $0x78] sm:$0xff]
    %v109 = vld [vmem:[%s1 + $0x80] sm:$0xff]
    %v110 = vld [vmem:[%s1 + $0x88] sm:$0xff]
    %v111 = vld [vmem:[%s1 + $0x90] sm:$0xff]
    %v112 = vld [vmem:[%s1 + $0x98] sm:$0xff]
    %v113 = vld [vmem:[%s1 + $0xa0] sm:$0xff]
    %v114 = vld [vmem:[%s1 + $0xa8] sm:$0xff]
    %v115 = vld [vmem:[%s1 + $0xb0] sm:$0xff]
    %v116 = vld [vmem:[%s1 + $0xb8] sm:$0xff]
    %v117 = vld [vmem:[%s1 + $0xc0] sm:$0xff]
    %v118 = vld [vmem:[%s1 + $0xc8] sm:$0xff]
    %v119 = vld [vmem:[%s1 + $0xd0] sm:$0xff]
    %v120 = vld [vmem:[%s1 + $0xd8] sm:$0xff]
    %v121 = vld [vmem:[%s1 + $0xe0] sm:$0xff]
    %v122 = vld [vmem:[%s1 + $0xe8] sm:$0xff]
    %v123 = vld [vmem:[%s1 + $0xf0] sm:$0xff]
    %v124 = vld [vmem:[%s1 + $0xf8] sm:$0xff]
    %v125 = vld [vmem:[%s1 + $0x100] sm:$0xff]
    %v126 = vld [vmem:[%s1 + $0x108] sm:$0xff]
    %v127 = vld [vmem:[%s1 + $0x110] sm:$0xff]
    %v128 = vld [vmem:[%s1 + $0x118] sm:$0xff]
    %v129 = vld [vmem:[%s1 + $0x120] sm:$0xff]
    %v130 = vld [vmem:[%s1 + $0x128] sm:$0xff]
    %v131 = vld [vmem:[%s1 + $0x130] sm:$0xff]
    %v132 = vld [vmem:[%s1 + $0x138] sm:$0xff]
    %v133 = vld [vmem:[%s1 + $0x140] sm:$0xff]
    %v134 = vld [vmem:[%s1 + $0x148] sm:$0xff]
    %v135 = vld [vmem:[%s1 + $0x150] sm:$0xff]
    %v136 = vld [vmem:[%s1 + $0x158] sm:$0xff]
    %v137 = vld [vmem:[%s1 + $0x160] sm:$0xff]
    %v138 = vld [vmem:[%s1 + $0x168] sm:$0xff]
    %v139 = vld [vmem:[%s1 + $0x170] sm:$0xff]
    %v140 = vld [vmem:[%s1 + $0x178] sm:$0xff]
    %v173 = vunpack.c.l.b16 %v61
    %v174 = vunpack.c.h.b16 %v61
    %v175 = vunpack.c.l.b16 %v62
    %v176 = vunpack.c.l.b16 %v63
    %v177 = vunpack.c.h.b16 %v63
    %v178 = vunpack.c.l.b16 %v64
    %v179 = vunpack.c.l.b16 %v65
    %v180 = vunpack.c.h.b16 %v65
    %v181 = vunpack.c.l.b16 %v66
    %v182 = vunpack.c.l.b16 %v67
    %v183 = vunpack.c.h.b16 %v67
    %v184 = vunpack.c.l.b16 %v68
    %v185 = vunpack.c.l.b16 %v69
    %v186 = vunpack.c.h.b16 %v69
    %v187 = vunpack.c.l.b16 %v70
    %v188 = vunpack.c.l.b16 %v71
    %v189 = vunpack.c.h.b16 %v71
    %v190 = vunpack.c.l.b16 %v72
    %v191 = vunpack.c.l.b16 %v73
    %v192 = vunpack.c.h.b16 %v73
    %v193 = vunpack.c.l.b16 %v74
    %v194 = vunpack.c.l.b16 %v75
    %v195 = vunpack.c.h.b16 %v75
    %v196 = vunpack.c.l.b16 %v76
    %v197 = vunpack.c.l.b16 %v77
    %v198 = vunpack.c.h.b16 %v77
    %v199 = vunpack.c.l.b16 %v78
    %v200 = vunpack.c.l.b16 %v79
    %v201 = vunpack.c.h.b16 %v79
    %v202 = vunpack.c.l.b16 %v80
    %v203 = vunpack.c.l.b16 %v81
    %v204 = vunpack.c.h.b16 %v81
    %v205 = vunpack.c.l.b16 %v82
    %v206 = vunpack.c.l.b16 %v83
    %v207 = vunpack.c.h.b16 %v83
    %v208 = vunpack.c.l.b16 %v84
    %v209 = vunpack.c.l.b16 %v85
    %v210 = vunpack.c.h.b16 %v85
    %v211 = vunpack.c.l.b16 %v86
    %v212 = vunpack.c.l.b16 %v87
    %v213 = vunpack.c.h.b16 %v87
    %v214 = vunpack.c.l.b16 %v88
    %v215 = vunpack.c.l.b16 %v89
    %v216 = vunpack.c.h.b16 %v89
    %v217 = vunpack.c.l.b16 %v90
    %v218 = vunpack.c.l.b16 %v91
    %v219 = vunpack.c.h.b16 %v91
    %v220 = vunpack.c.l.b16 %v92
    %v221 = vpack.c.b16 %v176, %v173
    %v222 = vpack.c.b16 %v177, %v174
    %v223 = vpack.c.b16 %v178, %v175
    %v224 = vpack.c.b16 %v182, %v179
    %v225 = vpack.c.b16 %v183, %v180
    %v226 = vpack.c.b16 %v184, %v181
    %v227 = vpack.c.b16 %v188, %v185
    %v228 = vpack.c.b16 %v189, %v186
    %v229 = vpack.c.b16 %v190, %v187
    %v230 = vpack.c.b16 %v194, %v191
    %v231 = vpack.c.b16 %v195, %v192
    %v232 = vpack.c.b16 %v196, %v193
    %v233 = vpack.c.b16 %v200, %v197
    %v234 = vpack.c.b16 %v201, %v198
    %v235 = vpack.c.b16 %v202, %v199
    %v236 = vpack.c.b16 %v206, %v203
    %v237 = vpack.c.b16 %v207, %v204
    %v238 = vpack.c.b16 %v208, %v205
    %v239 = vpack.c.b16 %v212, %v209
    %v240 = vpack.c.b16 %v213, %v210
    %v241 = vpack.c.b16 %v214, %v211
    %v242 = vpack.c.b16 %v218, %v215
    %v243 = vpack.c.b16 %v219, %v216
    %v244 = vpack.c.b16 %v220, %v217
    %v317 = vunpack.c.l.b16 %v93
    %v318 = vunpack.c.h.b16 %v93
    %v319 = vunpack.c.l.b16 %v94
    %v320 = vunpack.c.h.b16 %v94
    %v321 = vunpack.c.l.b16 %v95
    %v322 = vunpack.c.h.b16 %v95
    %v323 = vunpack.c.l.b16 %v96
    %v324 = vunpack.c.h.b16 %v96
    %v325 = vunpack.c.l.b16 %v97
    %v326 = vunpack.c.h.b16 %v97
    %v327 = vunpack.c.l.b16 %v98
    %v328 = vunpack.c.h.b16 %v98
    %v329 = vunpack.c.l.b16 %v99
    %v330 = vunpack.c.h.b16 %v99
    %v331 = vunpack.c.l.b16 %v100
    %v332 = vunpack.c.h.b16 %v100
    %v333 = vunpack.c.l.b16 %v101
    %v334 = vunpack.c.h.b16 %v101
    %v335 = vunpack.c.l.b16 %v102
    %v336 = vunpack.c.h.b16 %v102
    %v337 = vunpack.c.l.b16 %v103
    %v338 = vunpack.c.h.b16 %v103
    %v339 = vunpack.c.l.b16 %v104
    %v340 = vunpack.c.h.b16 %v104
    %v341 = vunpack.c.l.b16 %v105
    %v342 = vunpack.c.h.b16 %v105
    %v343 = vunpack.c.l.b16 %v106
    %v344 = vunpack.c.h.b16 %v106
    %v345 = vunpack.c.l.b16 %v107
    %v346 = vunpack.c.h.b16 %v107
    %v347 = vunpack.c.l.b16 %v108
    %v348 = vunpack.c.h.b16 %v108
    %v349 = vunpack.c.l.b16 %v109
    %v350 = vunpack.c.h.b16 %v109
    %v351 = vunpack.c.l.b16 %v110
    %v352 = vunpack.c.h.b16 %v110
    %v353 = vunpack.c.l.b16 %v111
    %v354 = vunpack.c.h.b16 %v111
    %v355 = vunpack.c.l.b16 %v112
    %v356 = vunpack.c.h.b16 %v112
    %v357 = vunpack.c.l.b16 %v113
    %v358 = vunpack.c.h.b16 %v113
    %v359 = vunpack.c.l.b16 %v114
    %v360 = vunpack.c.h.b16 %v114
    %v361 = vunpack.c.l.b16 %v115
    %v362 = vunpack.c.h.b16 %v115
    %v363 = vunpack.c.l.b16 %v116
    %v364 = vunpack.c.h.b16 %v116
    %v365 = vunpack.c.l.b16 %v117
    %v366 = vunpack.c.h.b16 %v117
    %v367 = vunpack.c.l.b16 %v118
    %v368 = vunpack.c.h.b16 %v118
    %v369 = vunpack.c.l.b16 %v119
    %v370 = vunpack.c.h.b16 %v119
    %v371 = vunpack.c.l.b16 %v120
    %v372 = vunpack.c.h.b16 %v120
    %v373 = vunpack.c.l.b16 %v121
    %v374 = vunpack.c.h.b16 %v121
    %v375 = vunpack.c.l.b16 %v122
    %v376 = vunpack.c.h.b16 %v122
    %v377 = vunpack.c.l.b16 %v123
    %v378 = vunpack.c.h.b16 %v123
    %v379 = vunpack.c.l.b16 %v124
    %v380 = vunpack.c.h.b16 %v124
    %v381 = vunpack.c.l.b16 %v125
    %v382 = vunpack.c.h.b16 %v125
    %v383 = vunpack.c.l.b16 %v126
    %v384 = vunpack.c.h.b16 %v126
    %v385 = vunpack.c.l.b16 %v127
    %v386 = vunpack.c.h.b16 %v127
    %v387 = vunpack.c.l.b16 %v128
    %v388 = vunpack.c.h.b16 %v128
    %v389 = vunpack.c.l.b16 %v129
    %v390 = vunpack.c.h.b16 %v129
    %v391 = vunpack.c.l.b16 %v130
    %v392 = vunpack.c.h.b16 %v130
    %v393 = vunpack.c.l.b16 %v131
    %v394 = vunpack.c.h.b16 %v131
    %v395 = vunpack.c.l.b16 %v132
    %v396 = vunpack.c.h.b16 %v132
    %v397 = vunpack.c.l.b16 %v133
    %v398 = vunpack.c.h.b16 %v133
    %v399 = vunpack.c.l.b16 %v134
    %v400 = vunpack.c.h.b16 %v134
    %v401 = vunpack.c.l.b16 %v135
    %v402 = vunpack.c.h.b16 %v135
    %v403 = vunpack.c.l.b16 %v136
    %v404 = vunpack.c.h.b16 %v136
    %v405 = vunpack.c.l.b16 %v137
    %v406 = vunpack.c.h.b16 %v137
    %v407 = vunpack.c.l.b16 %v138
    %v408 = vunpack.c.h.b16 %v138
    %v409 = vunpack.c.l.b16 %v139
    %v410 = vunpack.c.h.b16 %v139
    %v411 = vunpack.c.l.b16 %v140
    %v412 = vunpack.c.h.b16 %v140
    %v413 = vpack.c.b16 %v319, %v317
    %v414 = vpack.c.b16 %v320, %v318
    %v415 = vpack.c.b16 %v323, %v321
    %v416 = vpack.c.b16 %v324, %v322
    %v417 = vpack.c.b16 %v327, %v325
    %v418 = vpack.c.b16 %v328, %v326
    %v419 = vpack.c.b16 %v331, %v329
    %v420 = vpack.c.b16 %v332, %v330
    %v421 = vpack.c.b16 %v335, %v333
    %v422 = vpack.c.b16 %v336, %v334
    %v423 = vpack.c.b16 %v339, %v337
    %v424 = vpack.c.b16 %v340, %v338
    %v425 = vpack.c.b16 %v343, %v341
    %v426 = vpack.c.b16 %v344, %v342
    %v427 = vpack.c.b16 %v347, %v345
    %v428 = vpack.c.b16 %v348, %v346
    %v429 = vpack.c.b16 %v351, %v349
    %v430 = vpack.c.b16 %v352, %v350
    %v431 = vpack.c.b16 %v355, %v353
    %v432 = vpack.c.b16 %v356, %v354
    %v433 = vpack.c.b16 %v359, %v357
    %v434 = vpack.c.b16 %v360, %v358
    %v435 = vpack.c.b16 %v363, %v361
    %v436 = vpack.c.b16 %v364, %v362
    %v437 = vpack.c.b16 %v367, %v365
    %v438 = vpack.c.b16 %v368, %v366
    %v439 = vpack.c.b16 %v371, %v369
    %v440 = vpack.c.b16 %v372, %v370
    %v441 = vpack.c.b16 %v375, %v373
    %v442 = vpack.c.b16 %v376, %v374
    %v443 = vpack.c.b16 %v379, %v377
    %v444 = vpack.c.b16 %v380, %v378
    %v445 = vpack.c.b16 %v383, %v381
    %v446 = vpack.c.b16 %v384, %v382
    %v447 = vpack.c.b16 %v387, %v385
    %v448 = vpack.c.b16 %v388, %v386
    %v449 = vpack.c.b16 %v391, %v389
    %v450 = vpack.c.b16 %v392, %v390
    %v451 = vpack.c.b16 %v395, %v393
    %v452 = vpack.c.b16 %v396, %v394
    %v453 = vpack.c.b16 %v399, %v397
    %v454 = vpack.c.b16 %v400, %v398
    %v455 = vpack.c.b16 %v403, %v401
    %v456 = vpack.c.b16 %v404, %v402
    %v457 = vpack.c.b16 %v407, %v405
    %v458 = vpack.c.b16 %v408, %v406
    %v459 = vpack.c.b16 %v411, %v409
    %v460 = vpack.c.b16 %v412, %v410
    %509 = vmatpush.bf16.msra.mxu0 %v427
    %510 = vmatpush.bf16.msra.mxu0 %v425
    %511 = vmatpush.bf16.msra.mxu0 %v423
    %512 = vmatpush.bf16.msra.mxu0 %v421
    %513 = vmatpush.bf16.msra.mxu0 %v419
    %514 = vmatpush.bf16.msra.mxu0 %v417
    %515 = vmatpush.bf16.msra.mxu0 %v415
    %516 = vmatpush.bf16.msra.mxu0 %v413
    %517 = vmatmul.bf16.gmra.mxu0 %v221
    %v518 = vpop.f32.mrf.mxu0
    %v519 = vadd.f32 0.0, %v518
    %v520 = vpop.f32.mrf.mxu0
    %v521 = vadd.f32 0.0, %v520
    %522 = vmatmul.bf16.gmra.mxu0 %v224
    %v523 = vpop.f32.mrf.mxu0
    %v524 = vadd.f32 0.0, %v523
    %v525 = vpop.f32.mrf.mxu0
    %v526 = vadd.f32 0.0, %v525
    %527 = vmatmul.bf16.gmra.mxu0 %v227
    %v528 = vpop.f32.mrf.mxu0
    %v529 = vadd.f32 0.0, %v528
    %v530 = vpop.f32.mrf.mxu0
    %v531 = vadd.f32 0.0, %v530
    %532 = vmatmul.bf16.gmra.mxu0 %v230
    %v533 = vpop.f32.mrf.mxu0
    %v534 = vadd.f32 0.0, %v533
    %v535 = vpop.f32.mrf.mxu0
    %v536 = vadd.f32 0.0, %v535
    %537 = vmatmul.bf16.gmra.mxu0 %v233
    %v538 = vpop.f32.mrf.mxu0
    %v539 = vadd.f32 0.0, %v538
    %v540 = vpop.f32.mrf.mxu0
    %v541 = vadd.f32 0.0, %v540
    %542 = vmatmul.bf16.gmra.mxu0 %v236
    %v543 = vpop.f32.mrf.mxu0
    %v544 = vadd.f32 0.0, %v543
    %v545 = vpop.f32.mrf.mxu0
    %v546 = vadd.f32 0.0, %v545
    %547 = vmatmul.bf16.gmra.mxu0 %v239
    %v548 = vpop.f32.mrf.mxu0
    %v549 = vadd.f32 0.0, %v548
    %v550 = vpop.f32.mrf.mxu0
    %v551 = vadd.f32 0.0, %v550
    %552 = vmatmul.bf16.gmra.mxu0 %v242
    %v553 = vpop.f32.mrf.mxu0
    %v554 = vadd.f32 0.0, %v553
    %v555 = vpop.f32.mrf.mxu0
    %v556 = vadd.f32 0.0, %v555
    %557 = vdwg.mxu0
    %558 = vmatpush.bf16.msra.mxu0 %v443
    %559 = vmatpush.bf16.msra.mxu0 %v441
    %560 = vmatpush.bf16.msra.mxu0 %v439
    %561 = vmatpush.bf16.msra.mxu0 %v437
    %562 = vmatpush.bf16.msra.mxu0 %v435
    %563 = vmatpush.bf16.msra.mxu0 %v433
    %564 = vmatpush.bf16.msra.mxu0 %v431
    %565 = vmatpush.bf16.msra.mxu0 %v429
    %566 = vmatmul.bf16.gmra.mxu0 %v222
    %v567 = vpop.f32.mrf.mxu0
    %v568 = vadd.f32 %v519, %v567
    %v569 = vpop.f32.mrf.mxu0
    %v570 = vadd.f32 %v521, %v569
    %571 = vmatmul.bf16.gmra.mxu0 %v225
    %v572 = vpop.f32.mrf.mxu0
    %v573 = vadd.f32 %v524, %v572
    %v574 = vpop.f32.mrf.mxu0
    %v575 = vadd.f32 %v526, %v574
    %576 = vmatmul.bf16.gmra.mxu0 %v228
    %v577 = vpop.f32.mrf.mxu0
    %v578 = vadd.f32 %v529, %v577
    %v579 = vpop.f32.mrf.mxu0
    %v580 = vadd.f32 %v531, %v579
    %581 = vmatmul.bf16.gmra.mxu0 %v231
    %v582 = vpop.f32.mrf.mxu0
    %v583 = vadd.f32 %v534, %v582
    %v584 = vpop.f32.mrf.mxu0
    %v585 = vadd.f32 %v536, %v584
    %586 = vmatmul.bf16.gmra.mxu0 %v234
    %v587 = vpop.f32.mrf.mxu0
    %v588 = vadd.f32 %v539, %v587
    %v589 = vpop.f32.mrf.mxu0
    %v590 = vadd.f32 %v541, %v589
    %591 = vmatmul.bf16.gmra.mxu0 %v237
    %v592 = vpop.f32.mrf.mxu0
    %v593 = vadd.f32 %v544, %v592
    %v594 = vpop.f32.mrf.mxu0
    %v595 = vadd.f32 %v546, %v594
    %596 = vmatmul.bf16.gmra.mxu0 %v240
    %v597 = vpop.f32.mrf.mxu0
    %v598 = vadd.f32 %v549, %v597
    %v599 = vpop.f32.mrf.mxu0
    %v600 = vadd.f32 %v551, %v599
    %601 = vmatmul.bf16.gmra.mxu0 %v243
    %v602 = vpop.f32.mrf.mxu0
    %v603 = vadd.f32 %v554, %v602
    %v604 = vpop.f32.mrf.mxu0
    %v605 = vadd.f32 %v556, %v604
    %606 = vdwg.mxu0
    %607 = vmatpush.bf16.msra.mxu0 %v459
    %608 = vmatpush.bf16.msra.mxu0 %v457
    %609 = vmatpush.bf16.msra.mxu0 %v455
    %610 = vmatpush.bf16.msra.mxu0 %v453
    %611 = vmatpush.bf16.msra.mxu0 %v451
    %612 = vmatpush.bf16.msra.mxu0 %v449
    %613 = vmatpush.bf16.msra.mxu0 %v447
    %614 = vmatpush.bf16.msra.mxu0 %v445
    %615 = vmatmul.bf16.gmra.mxu0 %v223
    %v616 = vpop.f32.mrf.mxu0
    %v617 = vadd.f32 %v568, %v616
    %v618 = vpop.f32.mrf.mxu0
    %v619 = vadd.f32 %v570, %v618
    %620 = vmatmul.bf16.gmra.mxu0 %v226
    %v621 = vpop.f32.mrf.mxu0
    %v622 = vadd.f32 %v573, %v621
    %v623 = vpop.f32.mrf.mxu0
    %v624 = vadd.f32 %v575, %v623
    %625 = vmatmul.bf16.gmra.mxu0 %v229
    %v626 = vpop.f32.mrf.mxu0
    %v627 = vadd.f32 %v578, %v626
    %v628 = vpop.f32.mrf.mxu0
    %v629 = vadd.f32 %v580, %v628
    %630 = vmatmul.bf16.gmra.mxu0 %v232
    %v631 = vpop.f32.mrf.mxu0
    %v632 = vadd.f32 %v583, %v631
    %v633 = vpop.f32.mrf.mxu0
    %v634 = vadd.f32 %v585, %v633
    %635 = vmatmul.bf16.gmra.mxu0 %v235
    %v636 = vpop.f32.mrf.mxu0
    %v637 = vadd.f32 %v588, %v636
    %v638 = vpop.f32.mrf.mxu0
    %v639 = vadd.f32 %v590, %v638
    %640 = vmatmul.bf16.gmra.mxu0 %v238
    %v641 = vpop.f32.mrf.mxu0
    %v642 = vadd.f32 %v593, %v641
    %v643 = vpop.f32.mrf.mxu0
    %v644 = vadd.f32 %v595, %v643
    %645 = vmatmul.bf16.gmra.mxu0 %v241
    %v646 = vpop.f32.mrf.mxu0
    %v647 = vadd.f32 %v598, %v646
    %v648 = vpop.f32.mrf.mxu0
    %v649 = vadd.f32 %v600, %v648
    %650 = vmatmul.bf16.gmra.mxu0 %v244
    %v651 = vpop.f32.mrf.mxu0
    %v652 = vadd.f32 %v603, %v651
    %v653 = vpop.f32.mrf.mxu0
    %v654 = vadd.f32 %v605, %v653
    %655 = vdwg.mxu0
    %656 = vmatpush.bf16.msra.mxu0 %v428
    %657 = vmatpush.bf16.msra.mxu0 %v426
    %658 = vmatpush.bf16.msra.mxu0 %v424
    %659 = vmatpush.bf16.msra.mxu0 %v422
    %660 = vmatpush.bf16.msra.mxu0 %v420
    %661 = vmatpush.bf16.msra.mxu0 %v418
    %662 = vmatpush.bf16.msra.mxu0 %v416
    %663 = vmatpush.bf16.msra.mxu0 %v414
    %664 = vmatmul.bf16.gmra.mxu0 %v221
    %v665 = vpop.f32.mrf.mxu0
    %v666 = vadd.f32 0.0, %v665
    %v667 = vpop.f32.mrf.mxu0
    %v668 = vadd.f32 0.0, %v667
    %669 = vmatmul.bf16.gmra.mxu0 %v224
    %v670 = vpop.f32.mrf.mxu0
    %v671 = vadd.f32 0.0, %v670
    %v672 = vpop.f32.mrf.mxu0
    %v673 = vadd.f32 0.0, %v672
    %674 = vmatmul.bf16.gmra.mxu0 %v227
    %v675 = vpop.f32.mrf.mxu0
    %v676 = vadd.f32 0.0, %v675
    %v677 = vpop.f32.mrf.mxu0
    %v678 = vadd.f32 0.0, %v677
    %679 = vmatmul.bf16.gmra.mxu0 %v230
    %v680 = vpop.f32.mrf.mxu0
    %v681 = vadd.f32 0.0, %v680
    %v682 = vpop.f32.mrf.mxu0
    %v683 = vadd.f32 0.0, %v682
    %684 = vmatmul.bf16.gmra.mxu0 %v233
    %v685 = vpop.f32.mrf.mxu0
    %v686 = vadd.f32 0.0, %v685
    %v687 = vpop.f32.mrf.mxu0
    %v688 = vadd.f32 0.0, %v687
    %689 = vmatmul.bf16.gmra.mxu0 %v236
    %v690 = vpop.f32.mrf.mxu0
    %v691 = vadd.f32 0.0, %v690
    %v692 = vpop.f32.mrf.mxu0
    %v693 = vadd.f32 0.0, %v692
    %694 = vmatmul.bf16.gmra.mxu0 %v239
    %v695 = vpop.f32.mrf.mxu0
    %v696 = vadd.f32 0.0, %v695
    %v697 = vpop.f32.mrf.mxu0
    %v698 = vadd.f32 0.0, %v697
    %699 = vmatmul.bf16.gmra.mxu0 %v242
    %v700 = vpop.f32.mrf.mxu0
    %v701 = vadd.f32 0.0, %v700
    %v702 = vpop.f32.mrf.mxu0
    %v703 = vadd.f32 0.0, %v702
    %704 = vdwg.mxu0
    %705 = vmatpush.bf16.msra.mxu0 %v444
    %706 = vmatpush.bf16.msra.mxu0 %v442
    %707 = vmatpush.bf16.msra.mxu0 %v440
    %708 = vmatpush.bf16.msra.mxu0 %v438
    %709 = vmatpush.bf16.msra.mxu0 %v436
    %710 = vmatpush.bf16.msra.mxu0 %v434
    %711 = vmatpush.bf16.msra.mxu0 %v432
    %712 = vmatpush.bf16.msra.mxu0 %v430
    %713 = vmatmul.bf16.gmra.mxu0 %v222
    %v714 = vpop.f32.mrf.mxu0
    %v715 = vadd.f32 %v666, %v714
    %v716 = vpop.f32.mrf.mxu0
    %v717 = vadd.f32 %v668, %v716
    %718 = vmatmul.bf16.gmra.mxu0 %v225
    %v719 = vpop.f32.mrf.mxu0
    %v720 = vadd.f32 %v671, %v719
    %v721 = vpop.f32.mrf.mxu0
    %v722 = vadd.f32 %v673, %v721
    %723 = vmatmul.bf16.gmra.mxu0 %v228
    %v724 = vpop.f32.mrf.mxu0
    %v725 = vadd.f32 %v676, %v724
    %v726 = vpop.f32.mrf.mxu0
    %v727 = vadd.f32 %v678, %v726
    %728 = vmatmul.bf16.gmra.mxu0 %v231
    %v729 = vpop.f32.mrf.mxu0
    %v730 = vadd.f32 %v681, %v729
    %v731 = vpop.f32.mrf.mxu0
    %v732 = vadd.f32 %v683, %v731
    %733 = vmatmul.bf16.gmra.mxu0 %v234
    %v734 = vpop.f32.mrf.mxu0
    %v735 = vadd.f32 %v686, %v734
    %v736 = vpop.f32.mrf.mxu0
    %v737 = vadd.f32 %v688, %v736
    %738 = vmatmul.bf16.gmra.mxu0 %v237
    %v739 = vpop.f32.mrf.mxu0
    %v740 = vadd.f32 %v691, %v739
    %v741 = vpop.f32.mrf.mxu0
    %v742 = vadd.f32 %v693, %v741
    %743 = vmatmul.bf16.gmra.mxu0 %v240
    %v744 = vpop.f32.mrf.mxu0
    %v745 = vadd.f32 %v696, %v744
    %v746 = vpop.f32.mrf.mxu0
    %v747 = vadd.f32 %v698, %v746
    %748 = vmatmul.bf16.gmra.mxu0 %v243
    %v749 = vpop.f32.mrf.mxu0
    %v750 = vadd.f32 %v701, %v749
    %v751 = vpop.f32.mrf.mxu0
    %v752 = vadd.f32 %v703, %v751
    %753 = vdwg.mxu0
    %754 = vmatpush.bf16.msra.mxu0 %v460
    %755 = vmatpush.bf16.msra.mxu0 %v458
    %756 = vmatpush.bf16.msra.mxu0 %v456
    %757 = vmatpush.bf16.msra.mxu0 %v454
    %758 = vmatpush.bf16.msra.mxu0 %v452
    %759 = vmatpush.bf16.msra.mxu0 %v450
    %760 = vmatpush.bf16.msra.mxu0 %v448
    %761 = vmatpush.bf16.msra.mxu0 %v446
    %762 = vmatmul.bf16.gmra.mxu0 %v223
    %v763 = vpop.f32.mrf.mxu0
    %v764 = vadd.f32 %v715, %v763
    %v765 = vpop.f32.mrf.mxu0
    %v766 = vadd.f32 %v717, %v765
    %767 = vmatmul.bf16.gmra.mxu0 %v226
    %v768 = vpop.f32.mrf.mxu0
    %v769 = vadd.f32 %v720, %v768
    %v770 = vpop.f32.mrf.mxu0
    %v771 = vadd.f32 %v722, %v770
    %772 = vmatmul.bf16.gmra.mxu0 %v229
    %v773 = vpop.f32.mrf.mxu0
    %v774 = vadd.f32 %v725, %v773
    %v775 = vpop.f32.mrf.mxu0
    %v776 = vadd.f32 %v727, %v775
    %777 = vmatmul.bf16.gmra.mxu0 %v232
    %v778 = vpop.f32.mrf.mxu0
    %v779 = vadd.f32 %v730, %v778
    %v780 = vpop.f32.mrf.mxu0
    %v781 = vadd.f32 %v732, %v780
    %782 = vmatmul.bf16.gmra.mxu0 %v235
    %v783 = vpop.f32.mrf.mxu0
    %v784 = vadd.f32 %v735, %v783
    %v785 = vpop.f32.mrf.mxu0
    %v786 = vadd.f32 %v737, %v785
    %787 = vmatmul.bf16.gmra.mxu0 %v238
    %v788 = vpop.f32.mrf.mxu0
    %v789 = vadd.f32 %v740, %v788
    %v790 = vpop.f32.mrf.mxu0
    %v791 = vadd.f32 %v742, %v790
    %792 = vmatmul.bf16.gmra.mxu0 %v241
    %v793 = vpop.f32.mrf.mxu0
    %v794 = vadd.f32 %v745, %v793
    %v795 = vpop.f32.mrf.mxu0
    %v796 = vadd.f32 %v747, %v795
    %797 = vmatmul.bf16.gmra.mxu0 %v244
    %v798 = vpop.f32.mrf.mxu0
    %v799 = vadd.f32 %v750, %v798
    %v800 = vpop.f32.mrf.mxu0
    %v801 = vadd.f32 %v752, %v800
    %802 = vdwg.mxu0
    %v803 = vpack.c.bf16 %v617, %v617
    %v804 = vpack.c.bf16 %v619, %v619
    %v805 = vpack.c.bf16 %v622, %v622
    %v806 = vpack.c.bf16 %v624, %v624
    %v807 = vpack.c.bf16 %v627, %v627
    %v808 = vpack.c.bf16 %v629, %v629
    %v809 = vpack.c.bf16 %v632, %v632
    %v810 = vpack.c.bf16 %v634, %v634
    %v811 = vpack.c.bf16 %v637, %v637
    %v812 = vpack.c.bf16 %v639, %v639
    %v813 = vpack.c.bf16 %v642, %v642
    %v814 = vpack.c.bf16 %v644, %v644
    %v815 = vpack.c.bf16 %v647, %v647
    %v816 = vpack.c.bf16 %v649, %v649
    %v817 = vpack.c.bf16 %v652, %v652
    %v818 = vpack.c.bf16 %v654, %v654
    %v819 = vpack.c.bf16 %v764, %v764
    %v820 = vpack.c.bf16 %v766, %v766
    %v821 = vpack.c.bf16 %v769, %v769
    %v822 = vpack.c.bf16 %v771, %v771
    %v823 = vpack.c.bf16 %v774, %v774
    %v824 = vpack.c.bf16 %v776, %v776
    %v825 = vpack.c.bf16 %v779, %v779
    %v826 = vpack.c.bf16 %v781, %v781
    %v827 = vpack.c.bf16 %v784, %v784
    %v828 = vpack.c.bf16 %v786, %v786
    %v829 = vpack.c.bf16 %v789, %v789
    %v830 = vpack.c.bf16 %v791, %v791
    %v831 = vpack.c.bf16 %v794, %v794
    %v832 = vpack.c.bf16 %v796, %v796
    %v833 = vpack.c.bf16 %v799, %v799
    %v834 = vpack.c.bf16 %v801, %v801
    %v843 = vunpack.c.l.b16 %v803
    %v844 = vunpack.c.l.b16 %v804
    %v845 = vunpack.c.l.b16 %v805
    %v846 = vunpack.c.l.b16 %v806
    %v847 = vunpack.c.l.b16 %v807
    %v848 = vunpack.c.l.b16 %v808
    %v849 = vunpack.c.l.b16 %v809
    %v850 = vunpack.c.l.b16 %v810
    %v851 = vpack.c.b16 %v844, %v843
    %v852 = vpack.c.b16 %v846, %v845
    %v853 = vpack.c.b16 %v848, %v847
    %v854 = vpack.c.b16 %v850, %v849
    %855 = vrot.lane.b32.xlu0 %v851, 64
    %v856 = vpop.permute.xlu0 %855
    %857 = vrot.lane.b32.xlu0 %v852, 64
    %v858 = vpop.permute.xlu0 %857
    %859 = vrot.lane.b32.xlu0 %v853, 64
    %v860 = vpop.permute.xlu0 %859
    %861 = vrot.lane.b32.xlu0 %v854, 64
    %v862 = vpop.permute.xlu0 %861
    %vm863 = vcmask 523264
    %v865 = vsel %vm863, %v856, 0
    %v868 = vsel %vm863, %v858, 0
    %v871 = vsel %vm863, %v860, 0
    %v874 = vsel %vm863, %v862, 0
    %v877 = vsel %vm863, %v851, 0
    %v880 = vsel %vm863, %v852, 0
    %v883 = vsel %vm863, %v853, 0
    %v886 = vsel %vm863, %v854, 0
    %888 = vmatpush.bf16.xpose.msra.mxu0 0
    %889 = vmatpush.bf16.xpose.msra.mxu0 0
    %890 = vmatpush.bf16.xpose.msra.mxu0 0
    %891 = vmatpush.bf16.xpose.msra.mxu0 0
    %892 = vmatpush.bf16.xpose.msra.mxu0 %v886
    %893 = vmatpush.bf16.xpose.msra.mxu0 %v883
    %894 = vmatpush.bf16.xpose.msra.mxu0 %v880
    %895 = vmatpush.bf16.xpose.msra.mxu0 %v877
    %896 = vmatmul.bf16.gmra.mxu0 %v865
    %v897 = vpop.f32.mrf.mxu0
    %v898 = vadd.f32 0.0, %v897
    %v899 = vpop.f32.mrf.mxu0
    %v900 = vadd.f32 0.0, %v899
    %901 = vmatmul.bf16.gmra.mxu0 %v868
    %v902 = vpop.f32.mrf.mxu0
    %v903 = vadd.f32 0.0, %v902
    %v904 = vpop.f32.mrf.mxu0
    %v905 = vadd.f32 0.0, %v904
    %906 = vmatmul.bf16.gmra.mxu0 %v871
    %v907 = vpop.f32.mrf.mxu0
    %v908 = vadd.f32 0.0, %v907
    %v909 = vpop.f32.mrf.mxu0
    %v910 = vadd.f32 0.0, %v909
    %911 = vmatmul.bf16.gmra.mxu0 %v874
    %v912 = vpop.f32.mrf.mxu0
    %v913 = vadd.f32 0.0, %v912
    %v914 = vpop.f32.mrf.mxu0
    %v915 = vadd.f32 0.0, %v914
    %916 = vdwg.mxu0
    %v925 = vunpack.c.l.b16 %v811
    %v926 = vunpack.c.l.b16 %v812
    %v927 = vunpack.c.l.b16 %v813
    %v928 = vunpack.c.l.b16 %v814
    %v929 = vunpack.c.l.b16 %v815
    %v930 = vunpack.c.l.b16 %v816
    %v931 = vunpack.c.l.b16 %v817
    %v932 = vunpack.c.l.b16 %v818
    %v933 = vpack.c.b16 %v926, %v925
    %v934 = vpack.c.b16 %v928, %v927
    %v935 = vpack.c.b16 %v930, %v929
    %v936 = vpack.c.b16 %v932, %v931
    %937 = vrot.lane.b32.xlu0 %v933, 64
    %v938 = vpop.permute.xlu0 %937
    %939 = vrot.lane.b32.xlu0 %v934, 64
    %v940 = vpop.permute.xlu0 %939
    %941 = vrot.lane.b32.xlu0 %v935, 64
    %v942 = vpop.permute.xlu0 %941
    %943 = vrot.lane.b32.xlu0 %v936, 64
    %v944 = vpop.permute.xlu0 %943
    %v946 = vsel %vm863, %v938, 0
    %v949 = vsel %vm863, %v940, 0
    %v952 = vsel %vm863, %v942, 0
    %v955 = vsel %vm863, %v944, 0
    %v958 = vsel %vm863, %v933, 0
    %v961 = vsel %vm863, %v934, 0
    %v964 = vsel %vm863, %v935, 0
    %v967 = vsel %vm863, %v936, 0
    %969 = vmatpush.bf16.xpose.msra.mxu0 0
    %970 = vmatpush.bf16.xpose.msra.mxu0 0
    %971 = vmatpush.bf16.xpose.msra.mxu0 0
    %972 = vmatpush.bf16.xpose.msra.mxu0 0
    %973 = vmatpush.bf16.xpose.msra.mxu0 %v967
    %974 = vmatpush.bf16.xpose.msra.mxu0 %v964
    %975 = vmatpush.bf16.xpose.msra.mxu0 %v961
    %976 = vmatpush.bf16.xpose.msra.mxu0 %v958
    %977 = vmatmul.bf16.gmra.mxu0 %v946
    %v978 = vpop.f32.mrf.mxu0
    %v979 = vadd.f32 0.0, %v978
    %v980 = vpop.f32.mrf.mxu0
    %v981 = vadd.f32 0.0, %v980
    %982 = vmatmul.bf16.gmra.mxu0 %v949
    %v983 = vpop.f32.mrf.mxu0
    %v984 = vadd.f32 0.0, %v983
    %v985 = vpop.f32.mrf.mxu0
    %v986 = vadd.f32 0.0, %v985
    %987 = vmatmul.bf16.gmra.mxu0 %v952
    %v988 = vpop.f32.mrf.mxu0
    %v989 = vadd.f32 0.0, %v988
    %v990 = vpop.f32.mrf.mxu0
    %v991 = vadd.f32 0.0, %v990
    %992 = vmatmul.bf16.gmra.mxu0 %v955
    %v993 = vpop.f32.mrf.mxu0
    %v994 = vadd.f32 0.0, %v993
    %v995 = vpop.f32.mrf.mxu0
    %v996 = vadd.f32 0.0, %v995
    %997 = vdwg.mxu0
    %v998 = vlaneseq
    %v999 = vshrl.u32 %v998, 7
    %v1000 = vadd.s32 %v999, 8
    %v1001 = vadd.s32 %v999, 16
    %v1002 = vadd.s32 %v999, 24
    %v1003 = vadd.s32 %v999, 32
    %v1004 = vadd.s32 %v999, 40
    %v1005 = vadd.s32 %v999, 48
    %v1006 = vadd.s32 %v999, 56
    %v1007 = vlaneseq
    %v1008 = vand.u32 %v1007, 127
    %vm1009 = vcmp.le.s32.totalorder %v1008, %v999
    %vm1010 = vcmp.le.s32.totalorder %v1008, %v1000
    %vm1011 = vcmp.le.s32.totalorder %v1008, %v1001
    %vm1012 = vcmp.le.s32.totalorder %v1008, %v1002
    %vm1013 = vcmp.le.s32.totalorder %v1008, %v1003
    %vm1014 = vcmp.le.s32.totalorder %v1008, %v1004
    %vm1015 = vcmp.le.s32.totalorder %v1008, %v1005
    %vm1016 = vcmp.le.s32.totalorder %v1008, %v1006
    %v1017 = vsel %vm1009, 1, 0
    %v1018 = vsel %vm1010, 1, 0
    %v1019 = vsel %vm1011, 1, 0
    %v1020 = vsel %vm1012, 1, 0
    %v1021 = vsel %vm1013, 1, 0
    %v1022 = vsel %vm1014, 1, 0
    %v1023 = vsel %vm1015, 1, 0
    %v1024 = vsel %vm1016, 1, 0
    %vm1025 = vcmp.eq.s32.totalorder %v1017, 1
    %vm1026 = vcmp.eq.s32.totalorder %v1018, 1
    %vm1027 = vcmp.eq.s32.totalorder %v1019, 1
    %vm1028 = vcmp.eq.s32.totalorder %v1020, 1
    %vm1029 = vcmp.eq.s32.totalorder %v1021, 1
    %vm1030 = vcmp.eq.s32.totalorder %v1022, 1
    %vm1031 = vcmp.eq.s32.totalorder %v1023, 1
    %vm1032 = vcmp.eq.s32.totalorder %v1024, 1
    %v1033 = vsel %vm1025, %v898, -1e+30
    %v1034 = vsel %vm1026, %v900, -1e+30
    %v1035 = vsel %vm1027, %v903, -1e+30
    %v1036 = vsel %vm1028, %v905, -1e+30
    %v1037 = vsel %vm1029, %v908, -1e+30
    %v1038 = vsel %vm1030, %v910, -1e+30
    %v1039 = vsel %vm1031, %v913, -1e+30
    %v1040 = vsel %vm1032, %v915, -1e+30
    %v1041 = vsel %vm1025, %v979, -1e+30
    %v1042 = vsel %vm1026, %v981, -1e+30
    %v1043 = vsel %vm1027, %v984, -1e+30
    %v1044 = vsel %vm1028, %v986, -1e+30
    %v1045 = vsel %vm1029, %v989, -1e+30
    %v1046 = vsel %vm1030, %v991, -1e+30
    %v1047 = vsel %vm1031, %v994, -1e+30
    %v1048 = vsel %vm1032, %v996, -1e+30
    %v1049 = vsel %vm863, %v1033, -inf
    %1050 = vmax.xlane.f32.xlu0 %v1049
    %v1051 = vpop.xlane.xlu0 %1050
    %v1052 = vsel %vm863, %v1034, -inf
    %1053 = vmax.xlane.f32.xlu0 %v1052
    %v1054 = vpop.xlane.xlu0 %1053
    %v1055 = vsel %vm863, %v1035, -inf
    %1056 = vmax.xlane.f32.xlu0 %v1055
    %v1057 = vpop.xlane.xlu0 %1056
    %v1058 = vsel %vm863, %v1036, -inf
    %1059 = vmax.xlane.f32.xlu0 %v1058
    %v1060 = vpop.xlane.xlu0 %1059
    %v1061 = vsel %vm863, %v1037, -inf
    %1062 = vmax.xlane.f32.xlu0 %v1061
    %v1063 = vpop.xlane.xlu0 %1062
    %v1064 = vsel %vm863, %v1038, -inf
    %1065 = vmax.xlane.f32.xlu0 %v1064
    %v1066 = vpop.xlane.xlu0 %1065
    %v1067 = vsel %vm863, %v1039, -inf
    %1068 = vmax.xlane.f32.xlu0 %v1067
    %v1069 = vpop.xlane.xlu0 %1068
    %v1070 = vsel %vm863, %v1040, -inf
    %1071 = vmax.xlane.f32.xlu0 %v1070
    %v1072 = vpop.xlane.xlu0 %1071
    %v1073 = vsel %vm863, %v1041, -inf
    %1074 = vmax.xlane.f32.xlu0 %v1073
    %v1075 = vpop.xlane.xlu0 %1074
    %v1076 = vsel %vm863, %v1042, -inf
    %1077 = vmax.xlane.f32.xlu0 %v1076
    %v1078 = vpop.xlane.xlu0 %1077
    %v1079 = vsel %vm863, %v1043, -inf
    %1080 = vmax.xlane.f32.xlu0 %v1079
    %v1081 = vpop.xlane.xlu0 %1080
    %v1082 = vsel %vm863, %v1044, -inf
    %1083 = vmax.xlane.f32.xlu0 %v1082
    %v1084 = vpop.xlane.xlu0 %1083
    %v1085 = vsel %vm863, %v1045, -inf
    %1086 = vmax.xlane.f32.xlu0 %v1085
    %v1087 = vpop.xlane.xlu0 %1086
    %v1088 = vsel %vm863, %v1046, -inf
    %1089 = vmax.xlane.f32.xlu0 %v1088
    %v1090 = vpop.xlane.xlu0 %1089
    %v1091 = vsel %vm863, %v1047, -inf
    %1092 = vmax.xlane.f32.xlu0 %v1091
    %v1093 = vpop.xlane.xlu0 %1092
    %v1094 = vsel %vm863, %v1048, -inf
    %1095 = vmax.xlane.f32.xlu0 %v1094
    %v1096 = vpop.xlane.xlu0 %1095
    %v1097 = vsub.f32 %v1033, %v1051
    %v1098 = vsub.f32 %v1034, %v1054
    %v1099 = vsub.f32 %v1035, %v1057
    %v1100 = vsub.f32 %v1036, %v1060
    %v1101 = vsub.f32 %v1037, %v1063
    %v1102 = vsub.f32 %v1038, %v1066
    %v1103 = vsub.f32 %v1039, %v1069
    %v1104 = vsub.f32 %v1040, %v1072
    %v1105 = vsub.f32 %v1041, %v1075
    %v1106 = vsub.f32 %v1042, %v1078
    %v1107 = vsub.f32 %v1043, %v1081
    %v1108 = vsub.f32 %v1044, %v1084
    %v1109 = vsub.f32 %v1045, %v1087
    %v1110 = vsub.f32 %v1046, %v1090
    %v1111 = vsub.f32 %v1047, %v1093
    %v1112 = vsub.f32 %v1048, %v1096
    %v1113 = vmul.f32 %v1097, 1.442695
    %v1114 = vpow.pop %v1113
    %v1115 = vmul.f32 %v1098, 1.442695
    %v1116 = vpow.pop %v1115
    %v1117 = vmul.f32 %v1099, 1.442695
    %v1118 = vpow.pop %v1117
    %v1119 = vmul.f32 %v1100, 1.442695
    %v1120 = vpow.pop %v1119
    %v1121 = vmul.f32 %v1101, 1.442695
    %v1122 = vpow.pop %v1121
    %v1123 = vmul.f32 %v1102, 1.442695
    %v1124 = vpow.pop %v1123
    %v1125 = vmul.f32 %v1103, 1.442695
    %v1126 = vpow.pop %v1125
    %v1127 = vmul.f32 %v1104, 1.442695
    %v1128 = vpow.pop %v1127
    %v1129 = vmul.f32 %v1105, 1.442695
    %v1130 = vpow.pop %v1129
    %v1131 = vmul.f32 %v1106, 1.442695
    %v1132 = vpow.pop %v1131
    %v1133 = vmul.f32 %v1107, 1.442695
    %v1134 = vpow.pop %v1133
    %v1135 = vmul.f32 %v1108, 1.442695
    %v1136 = vpow.pop %v1135
    %v1137 = vmul.f32 %v1109, 1.442695
    %v1138 = vpow.pop %v1137
    %v1139 = vmul.f32 %v1110, 1.442695
    %v1140 = vpow.pop %v1139
    %v1141 = vmul.f32 %v1111, 1.442695
    %v1142 = vpow.pop %v1141
    %v1143 = vmul.f32 %v1112, 1.442695
    %v1144 = vpow.pop %v1143
    %v1145 = vsel %vm863, %v1114, 0.0
    %1146 = vadd.xlane.f32.xlu0 %v1145
    %v1147 = vpop.xlane.xlu0 %1146
    %v1148 = vsel %vm863, %v1116, 0.0
    %1149 = vadd.xlane.f32.xlu0 %v1148
    %v1150 = vpop.xlane.xlu0 %1149
    %v1151 = vsel %vm863, %v1118, 0.0
    %1152 = vadd.xlane.f32.xlu0 %v1151
    %v1153 = vpop.xlane.xlu0 %1152
    %v1154 = vsel %vm863, %v1120, 0.0
    %1155 = vadd.xlane.f32.xlu0 %v1154
    %v1156 = vpop.xlane.xlu0 %1155
    %v1157 = vsel %vm863, %v1122, 0.0
    %1158 = vadd.xlane.f32.xlu0 %v1157
    %v1159 = vpop.xlane.xlu0 %1158
    %v1160 = vsel %vm863, %v1124, 0.0
    %1161 = vadd.xlane.f32.xlu0 %v1160
    %v1162 = vpop.xlane.xlu0 %1161
    %v1163 = vsel %vm863, %v1126, 0.0
    %1164 = vadd.xlane.f32.xlu0 %v1163
    %v1165 = vpop.xlane.xlu0 %1164
    %v1166 = vsel %vm863, %v1128, 0.0
    %1167 = vadd.xlane.f32.xlu0 %v1166
    %v1168 = vpop.xlane.xlu0 %1167
    %v1169 = vsel %vm863, %v1130, 0.0
    %1170 = vadd.xlane.f32.xlu0 %v1169
    %v1171 = vpop.xlane.xlu0 %1170
    %v1172 = vsel %vm863, %v1132, 0.0
    %1173 = vadd.xlane.f32.xlu0 %v1172
    %v1174 = vpop.xlane.xlu0 %1173
    %v1175 = vsel %vm863, %v1134, 0.0
    %1176 = vadd.xlane.f32.xlu0 %v1175
    %v1177 = vpop.xlane.xlu0 %1176
    %v1178 = vsel %vm863, %v1136, 0.0
    %1179 = vadd.xlane.f32.xlu0 %v1178
    %v1180 = vpop.xlane.xlu0 %1179
    %v1181 = vsel %vm863, %v1138, 0.0
    %1182 = vadd.xlane.f32.xlu0 %v1181
    %v1183 = vpop.xlane.xlu0 %1182
    %v1184 = vsel %vm863, %v1140, 0.0
    %1185 = vadd.xlane.f32.xlu0 %v1184
    %v1186 = vpop.xlane.xlu0 %1185
    %v1187 = vsel %vm863, %v1142, 0.0
    %1188 = vadd.xlane.f32.xlu0 %v1187
    %v1189 = vpop.xlane.xlu0 %1188
    %v1190 = vsel %vm863, %v1144, 0.0
    %1191 = vadd.xlane.f32.xlu0 %v1190
    %v1192 = vpop.xlane.xlu0 %1191
    %v1193 = vrcp.pop %v1147
    %v1194 = vrcp.pop %v1150
    %v1195 = vrcp.pop %v1153
    %v1196 = vrcp.pop %v1156
    %v1197 = vrcp.pop %v1159
    %v1198 = vrcp.pop %v1162
    %v1199 = vrcp.pop %v1165
    %v1200 = vrcp.pop %v1168
    %v1201 = vrcp.pop %v1171
    %v1202 = vrcp.pop %v1174
    %v1203 = vrcp.pop %v1177
    %v1204 = vrcp.pop %v1180
    %v1205 = vrcp.pop %v1183
    %v1206 = vrcp.pop %v1186
    %v1207 = vrcp.pop %v1189
    %v1208 = vrcp.pop %v1192
    %v1209 = vmul.f32 %v1114, %v1193
    %v1210 = vmul.f32 %v1116, %v1194
    %v1211 = vmul.f32 %v1118, %v1195
    %v1212 = vmul.f32 %v1120, %v1196
    %v1213 = vmul.f32 %v1122, %v1197
    %v1214 = vmul.f32 %v1124, %v1198
    %v1215 = vmul.f32 %v1126, %v1199
    %v1216 = vmul.f32 %v1128, %v1200
    %v1217 = vmul.f32 %v1130, %v1201
    %v1218 = vmul.f32 %v1132, %v1202
    %v1219 = vmul.f32 %v1134, %v1203
    %v1220 = vmul.f32 %v1136, %v1204
    %v1221 = vmul.f32 %v1138, %v1205
    %v1222 = vmul.f32 %v1140, %v1206
    %v1223 = vmul.f32 %v1142, %v1207
    %v1224 = vmul.f32 %v1144, %v1208
    %v1225 = vpack.c.bf16 %v1209, %v1209
    %v1226 = vpack.c.bf16 %v1210, %v1210
    %v1227 = vpack.c.bf16 %v1211, %v1211
    %v1228 = vpack.c.bf16 %v1212, %v1212
    %v1229 = vpack.c.bf16 %v1213, %v1213
    %v1230 = vpack.c.bf16 %v1214, %v1214
    %v1231 = vpack.c.bf16 %v1215, %v1215
    %v1232 = vpack.c.bf16 %v1216, %v1216
    %v1233 = vpack.c.bf16 %v1217, %v1217
    %v1234 = vpack.c.bf16 %v1218, %v1218
    %v1235 = vpack.c.bf16 %v1219, %v1219
    %v1236 = vpack.c.bf16 %v1220, %v1220
    %v1237 = vpack.c.bf16 %v1221, %v1221
    %v1238 = vpack.c.bf16 %v1222, %v1222
    %v1239 = vpack.c.bf16 %v1223, %v1223
    %v1240 = vpack.c.bf16 %v1224, %v1224
    %v1249 = vunpack.c.l.b16 %v1225
    %v1250 = vunpack.c.l.b16 %v1226
    %v1251 = vunpack.c.l.b16 %v1227
    %v1252 = vunpack.c.l.b16 %v1228
    %v1253 = vunpack.c.l.b16 %v1229
    %v1254 = vunpack.c.l.b16 %v1230
    %v1255 = vunpack.c.l.b16 %v1231
    %v1256 = vunpack.c.l.b16 %v1232
    %v1257 = vpack.c.b16 %v1250, %v1249
    %v1258 = vpack.c.b16 %v1252, %v1251
    %v1259 = vpack.c.b16 %v1254, %v1253
    %v1260 = vpack.c.b16 %v1256, %v1255
    %v1269 = vunpack.c.l.b16 %v819
    %v1270 = vunpack.c.l.b16 %v820
    %v1271 = vunpack.c.l.b16 %v821
    %v1272 = vunpack.c.l.b16 %v822
    %v1273 = vunpack.c.l.b16 %v823
    %v1274 = vunpack.c.l.b16 %v824
    %v1275 = vunpack.c.l.b16 %v825
    %v1276 = vunpack.c.l.b16 %v826
    %v1277 = vpack.c.b16 %v1270, %v1269
    %v1278 = vpack.c.b16 %v1272, %v1271
    %v1279 = vpack.c.b16 %v1274, %v1273
    %v1280 = vpack.c.b16 %v1276, %v1275
    %v1286 = vsel %vm863, %v1257, 0
    %v1289 = vsel %vm863, %v1258, 0
    %v1292 = vsel %vm863, %v1259, 0
    %v1295 = vsel %vm863, %v1260, 0
    %1297 = vmatpush.bf16.msra.mxu0 0
    %1298 = vmatpush.bf16.msra.mxu0 0
    %1299 = vmatpush.bf16.msra.mxu0 0
    %1300 = vmatpush.bf16.msra.mxu0 0
    %1301 = vmatpush.bf16.msra.mxu0 %v1280
    %1302 = vmatpush.bf16.msra.mxu0 %v1279
    %1303 = vmatpush.bf16.msra.mxu0 %v1278
    %1304 = vmatpush.bf16.msra.mxu0 %v1277
    %1305 = vmatmul.bf16.gmra.mxu0 %v1286
    %v1306 = vpop.f32.mrf.mxu0
    %v1307 = vadd.f32 0.0, %v1306
    %v1308 = vpop.f32.mrf.mxu0
    %v1309 = vadd.f32 0.0, %v1308
    %1310 = vmatmul.bf16.gmra.mxu0 %v1289
    %v1311 = vpop.f32.mrf.mxu0
    %v1312 = vadd.f32 0.0, %v1311
    %v1313 = vpop.f32.mrf.mxu0
    %v1314 = vadd.f32 0.0, %v1313
    %1315 = vmatmul.bf16.gmra.mxu0 %v1292
    %v1316 = vpop.f32.mrf.mxu0
    %v1317 = vadd.f32 0.0, %v1316
    %v1318 = vpop.f32.mrf.mxu0
    %v1319 = vadd.f32 0.0, %v1318
    %1320 = vmatmul.bf16.gmra.mxu0 %v1295
    %v1321 = vpop.f32.mrf.mxu0
    %v1322 = vadd.f32 0.0, %v1321
    %v1323 = vpop.f32.mrf.mxu0
    %v1324 = vadd.f32 0.0, %v1323
    %1325 = vdwg.mxu0
    %v1334 = vunpack.c.l.b16 %v1233
    %v1335 = vunpack.c.l.b16 %v1234
    %v1336 = vunpack.c.l.b16 %v1235
    %v1337 = vunpack.c.l.b16 %v1236
    %v1338 = vunpack.c.l.b16 %v1237
    %v1339 = vunpack.c.l.b16 %v1238
    %v1340 = vunpack.c.l.b16 %v1239
    %v1341 = vunpack.c.l.b16 %v1240
    %v1342 = vpack.c.b16 %v1335, %v1334
    %v1343 = vpack.c.b16 %v1337, %v1336
    %v1344 = vpack.c.b16 %v1339, %v1338
    %v1345 = vpack.c.b16 %v1341, %v1340
    %v1354 = vunpack.c.l.b16 %v827
    %v1355 = vunpack.c.l.b16 %v828
    %v1356 = vunpack.c.l.b16 %v829
    %v1357 = vunpack.c.l.b16 %v830
    %v1358 = vunpack.c.l.b16 %v831
    %v1359 = vunpack.c.l.b16 %v832
    %v1360 = vunpack.c.l.b16 %v833
    %v1361 = vunpack.c.l.b16 %v834
    %v1362 = vpack.c.b16 %v1355, %v1354
    %v1363 = vpack.c.b16 %v1357, %v1356
    %v1364 = vpack.c.b16 %v1359, %v1358
    %v1365 = vpack.c.b16 %v1361, %v1360
    %v1371 = vsel %vm863, %v1342, 0
    %v1374 = vsel %vm863, %v1343, 0
    %v1377 = vsel %vm863, %v1344, 0
    %v1380 = vsel %vm863, %v1345, 0
    %1382 = vmatpush.bf16.msra.mxu0 0
    %1383 = vmatpush.bf16.msra.mxu0 0
    %1384 = vmatpush.bf16.msra.mxu0 0
    %1385 = vmatpush.bf16.msra.mxu0 0
    %1386 = vmatpush.bf16.msra.mxu0 %v1365
    %1387 = vmatpush.bf16.msra.mxu0 %v1364
    %1388 = vmatpush.bf16.msra.mxu0 %v1363
    %1389 = vmatpush.bf16.msra.mxu0 %v1362
    %1390 = vmatmul.bf16.gmra.mxu0 %v1371
    %v1391 = vpop.f32.mrf.mxu0
    %v1392 = vadd.f32 0.0, %v1391
    %v1393 = vpop.f32.mrf.mxu0
    %v1394 = vadd.f32 0.0, %v1393
    %1395 = vmatmul.bf16.gmra.mxu0 %v1374
    %v1396 = vpop.f32.mrf.mxu0
    %v1397 = vadd.f32 0.0, %v1396
    %v1398 = vpop.f32.mrf.mxu0
    %v1399 = vadd.f32 0.0, %v1398
    %1400 = vmatmul.bf16.gmra.mxu0 %v1377
    %v1401 = vpop.f32.mrf.mxu0
    %v1402 = vadd.f32 0.0, %v1401
    %v1403 = vpop.f32.mrf.mxu0
    %v1404 = vadd.f32 0.0, %v1403
    %1405 = vmatmul.bf16.gmra.mxu0 %v1380
    %v1406 = vpop.f32.mrf.mxu0
    %v1407 = vadd.f32 0.0, %v1406
    %v1408 = vpop.f32.mrf.mxu0
    %v1409 = vadd.f32 0.0, %v1408
    %1410 = vdwg.mxu0
    %v1411 = vpack.c.bf16 %v1307, %v1307
    %v1412 = vpack.c.bf16 %v1309, %v1309
    %v1413 = vpack.c.bf16 %v1312, %v1312
    %v1414 = vpack.c.bf16 %v1314, %v1314
    %v1415 = vpack.c.bf16 %v1317, %v1317
    %v1416 = vpack.c.bf16 %v1319, %v1319
    %v1417 = vpack.c.bf16 %v1322, %v1322
    %v1418 = vpack.c.bf16 %v1324, %v1324
    %v1419 = vpack.c.bf16 %v1392, %v1392
    %v1420 = vpack.c.bf16 %v1394, %v1394
    %v1421 = vpack.c.bf16 %v1397, %v1397
    %v1422 = vpack.c.bf16 %v1399, %v1399
    %v1423 = vpack.c.bf16 %v1402, %v1402
    %v1424 = vpack.c.bf16 %v1404, %v1404
    %v1425 = vpack.c.bf16 %v1407, %v1407
    %v1426 = vpack.c.bf16 %v1409, %v1409
    %vm1427 = vcmask 519168
    %1428 = vst.msk [vmem:[#allocation2] sm:$0xf] %vm1427, %v1411
    %1429 = vst.msk [vmem:[#allocation2 + $0x4] sm:$0xf] %vm1427, %v1412
    %1430 = vst.msk [vmem:[#allocation2 + $0x8] sm:$0xf] %vm1427, %v1413
    %1431 = vst.msk [vmem:[#allocation2 + $0xc] sm:$0xf] %vm1427, %v1414
    %1432 = vst.msk [vmem:[#allocation2 + $0x10] sm:$0xf] %vm1427, %v1415
    %1433 = vst.msk [vmem:[#allocation2 + $0x14] sm:$0xf] %vm1427, %v1416
    %1434 = vst.msk [vmem:[#allocation2 + $0x18] sm:$0xf] %vm1427, %v1417
    %1435 = vst.msk [vmem:[#allocation2 + $0x1c] sm:$0xf] %vm1427, %v1418
    %1436 = vst.msk [vmem:[#allocation2 + $0x20] sm:$0xf] %vm1427, %v1419
    %1437 = vst.msk [vmem:[#allocation2 + $0x24] sm:$0xf] %vm1427, %v1420
    %1438 = vst.msk [vmem:[#allocation2 + $0x28] sm:$0xf] %vm1427, %v1421
    %1439 = vst.msk [vmem:[#allocation2 + $0x2c] sm:$0xf] %vm1427, %v1422
    %1440 = vst.msk [vmem:[#allocation2 + $0x30] sm:$0xf] %vm1427, %v1423
    %1441 = vst.msk [vmem:[#allocation2 + $0x34] sm:$0xf] %vm1427, %v1424
    %1442 = vst.msk [vmem:[#allocation2 + $0x38] sm:$0xf] %vm1427, %v1425
    %1443 = vst.msk [vmem:[#allocation2 + $0x3c] sm:$0xf] %vm1427, %v1426
    // Predicated region
    $region10: #{tpu_custom_call.1} parent=1 // pred_check
      _
    $region11: #{tpu_custom_call.1} parent=1 // pred_check_branch
      %1445 = sbr.rel (0) target = $region13
    $region12: #{tpu_custom_call.1} parent=1 // pred_region
      %1447 = vsyncadd [#allocation3], 0
      %s1448 = sshll.u32 [#allocation2], 4
      %s1449 = int_to_ptr.vmem [resolvable:$true] %s1448
      %s1450 = sshll.u32 %s2, 4
      %s1451 = int_to_ptr.hbm [resolvable:$true] %s1450
      %1456 = dma.vmem_to_hbm [thread:$0]  %s1449, 1024, %s1451, [#allocation3], 64, 64, 4
    $region13: #{tpu_custom_call.1} parent=1 // pred_fallthru
      _
    // Predicated region
    $region14: #{tpu_custom_call.1} parent=1 // pred_check
      _
    $region15: #{tpu_custom_call.1} parent=1 // pred_check_branch
      %1458 = sbr.rel (0) target = $region17
    $region16: #{tpu_custom_call.1} parent=1 // pred_region
      %1460 = dma.done [#allocation3], 1024
    $region17: #{tpu_custom_call.1} parent=1 // pred_fallthru
      _
    %1461 = vsyncpa [#allocation3], 1

</llo_original>
